<compile_context>
chip_gen: v5e
topology: v5e:2x2
jax: 0.10.0
libtpu: 0.0.40
codegen_flags: <defaults>
</compile_context>

<pallas_src>
import functools

import jax
import jax.numpy as jnp
from jax.experimental import pallas as pl
from jax.experimental.pallas import tpu as pltpu


def _mlp_kernel(x_ref, p_ref, o_ref):
    # Shapes (all static, batch on the lane axis, lanes padded to 128k):
    #   x_ref: (F, Np)               input, batch on lanes
    #   p_ref: (H, F + 1 + O + 1)    packed [w1 | b1 | w2^T | b2(first O rows)]
    #   o_ref: (O, Np)               output, batch on lanes
    n_feature = x_ref.shape[0]
    n_hidden = p_ref.shape[0]
    n_output = o_ref.shape[0]

    w1 = p_ref[:, 0:n_feature]                                   # (H, F)
    b1 = p_ref[:, n_feature:n_feature + 1]                       # (H, 1)
    w2t = p_ref[:, n_feature + 1:n_feature + 1 + n_output]       # (H, O)
    b2 = p_ref[0:n_output,
               n_feature + 1 + n_output:n_feature + 2 + n_output]  # (O, 1)

    x = x_ref[...]                                               # (F, Np)

    # ---- Layer 1: h[h, n] = sum_f w1[h, f] * x[f, n] ------------------------
    if n_feature >= 8 and n_hidden >= 128:
        # Size-gated MXU path (128 = v5e MXU tile; padding-dominated below that).
        h = jnp.dot(w1, x, preferred_element_type=jnp.float32)
    else:
        # Tiny F -> per-feature VPU broadcast outer product, skip the MXU.
        h = w1[:, 0:1] * x[0:1, :]
        for f in range(1, n_feature):
            h = h + w1[:, f:f + 1] * x[f:f + 1, :]
    h = jnp.maximum(h + b1, 0.0)                                 # (H, Np) relu

    # ---- Layer 2: y[o, n] = sum_h w2t[h, o] * h[h, n] + b2[o] ----------------
    if n_hidden >= 128 and n_output >= 8:
        # Size-gated MXU path; contract over H without materializing w2t.T.
        y = jnp.einsum("ho,hn->on", w2t, h,
                       preferred_element_type=jnp.float32)       # (O, Np)
    else:
        # Vectorized VPU multiply + XLU sublane reduce; w2 slices hoisted,
        # single fused epilogue, one unmasked full-block store below.
        rows = [jnp.sum(w2t[:, o:o + 1] * h, axis=0, keepdims=True)
                for o in range(n_output)]
        y = rows[0] if n_output == 1 else jnp.concatenate(rows, axis=0)

    o_ref[...] = (y + b2).astype(o_ref.dtype)                    # one dense store


def prepare_params(w1, b1, w2, b2):
    """Pack PyTorch-layout Linear params once into the kernel's (H, F+1+O+1) slab.

    Do this outside the per-call path; reuse the slab across calls so no
    weight relayout HLOs are issued per forward pass.
    """
    h_dim, _ = w1.shape
    o_dim = w2.shape[0]
    b2_col = jnp.zeros((h_dim, 1), jnp.float32).at[:o_dim, 0].set(
        b2.astype(jnp.float32))
    return jnp.concatenate(
        [w1.astype(jnp.float32),
         b1.reshape(h_dim, 1).astype(jnp.float32),
         w2.T.astype(jnp.float32),
         b2_col],
        axis=1)                                                   # (H, F+1+O+1)


@functools.partial(jax.jit, static_argnames=("n_output",))
def net_forward(x, params, n_output):
    """Pallas forward for Net: Linear -> ReLU -> Linear.

    x      : (N, F) float32
    params : (H, F+1+O+1) float32 slab from prepare_params()
    returns: (N, O) float32
    """
    n, f = x.shape
    h_dim = params.shape[0]
    o_dim = n_output

    # Pad the batch/lane axis to a multiple of 128 so x, h and the output are
    # lane-dense (unmasked stores). Padded lanes are sliced off at the end.
    n_pad = ((n + 127) // 128) * 128
    x_t = jnp.zeros((f, n_pad), jnp.float32).at[:, :n].set(x.T)   # (F, Np)

    flops = 2 * n * f * h_dim + 2 * n * h_dim * o_dim + n * h_dim
    bytes_accessed = 4 * (f * n_pad + params.size + o_dim * n_pad)

    vmem = pl.BlockSpec(memory_space=pltpu.MemorySpace.VMEM)
    out_t = pl.pallas_call(
        _mlp_kernel,
        out_shape=jax.ShapeDtypeStruct((o_dim, n_pad), jnp.float32),
        in_specs=[vmem, vmem],
        out_specs=vmem,
        cost_estimate=pl.CostEstimate(
            flops=flops, transcendentals=0, bytes_accessed=bytes_accessed),
    )(x_t, params)                                                # (O, Np)

    # Single slice+transpose back to the PyTorch (N, O) layout.  If the
    # consumer can take (O, N) directly, return out_t[:, :n] instead.
    return out_t[:, :n].T


if __name__ == "__main__":
    # Module config from the original script: Net(n_feature=1, n_hidden=10, n_output=1)
    n_feature, n_hidden, n_output = 1, 10, 1
    batch = 100  # x = unsqueeze(linspace(-1, 1, 100), dim=1)

    key = jax.random.PRNGKey(0)
    k1, k2, k3, k4 = jax.random.split(key, 4)

    # Deterministic init mimicking PyTorch Linear default (uniform +/- 1/sqrt(fan_in)).
    bound1 = 1.0 / jnp.sqrt(jnp.float32(n_feature))
    bound2 = 1.0 / jnp.sqrt(jnp.float32(n_hidden))
    w1 = jax.random.uniform(k1, (n_hidden, n_feature), jnp.float32, -bound1, bound1)
    b1 = jax.random.uniform(k2, (n_hidden,), jnp.float32, -bound1, bound1)
    w2 = jax.random.uniform(k3, (n_output, n_hidden), jnp.float32, -bound2, bound2)
    b2 = jax.random.uniform(k4, (n_output,), jnp.float32, -bound2, bound2)

    x = jnp.linspace(-1.0, 1.0, batch, dtype=jnp.float32).reshape(batch, 1)

    # Pack weights once (kernel layout), then run the forward pass.
    params = prepare_params(w1, b1, w2, b2)
    out = net_forward(x, params, n_output)
    jax.block_until_ready(out)

    # Pure-JAX reference check.
    ref = jnp.maximum(x @ w1.T + b1, 0.0) @ w2.T + b2
    assert out.shape == (batch, n_output)
    assert jnp.allclose(out, ref, atol=1e-5, rtol=1e-5)

    print("KERNEL_OK")
</pallas_src>

<mosaic_0001>
module attributes {stable_mosaic.version = 11 : i64} {
  func.func @_mlp_kernel(%arg0: memref<1x128xf32, #tpu.memory_space<vmem>>, %arg1: memref<10x4xf32, #tpu.memory_space<vmem>>, %arg2: memref<1x128xf32, #tpu.memory_space<vmem>>) attributes {dimension_semantics = [], scalar_prefetch = 0 : i64, scratch_operands = 0 : i64, tpu.core_type = #tpu.core_type<tc>} {
    %c0 = arith.constant 0 : index
    %c0_0 = arith.constant 0 : index
    %0 = vector.load %arg1[%c0, %c0_0] : memref<10x4xf32, #tpu.memory_space<vmem>>, vector<10x1xf32>
    %c0_1 = arith.constant 0 : index
    %c1 = arith.constant 1 : index
    %1 = vector.load %arg1[%c0_1, %c1] : memref<10x4xf32, #tpu.memory_space<vmem>>, vector<10x1xf32>
    %c0_2 = arith.constant 0 : index
    %c2 = arith.constant 2 : index
    %2 = vector.load %arg1[%c0_2, %c2] : memref<10x4xf32, #tpu.memory_space<vmem>>, vector<10x1xf32>
    %c0_3 = arith.constant 0 : index
    %c3 = arith.constant 3 : index
    %3 = vector.load %arg1[%c0_3, %c3] : memref<10x4xf32, #tpu.memory_space<vmem>>, vector<1x1xf32>
    %c0_4 = arith.constant 0 : index
    %c0_5 = arith.constant 0 : index
    %4 = vector.load %arg0[%c0_4, %c0_5] : memref<1x128xf32, #tpu.memory_space<vmem>>, vector<1x128xf32>
    %5 = vector.broadcast %0 : vector<10x1xf32> to vector<10x128xf32>
    %6 = vector.broadcast %4 : vector<1x128xf32> to vector<10x128xf32>
    %7 = arith.mulf %5, %6 : vector<10x128xf32>
    %8 = vector.broadcast %1 : vector<10x1xf32> to vector<10x128xf32>
    %9 = arith.addf %7, %8 : vector<10x128xf32>
    %cst = arith.constant 0.000000e+00 : f32
    %10 = vector.broadcast %cst : f32 to vector<10x128xf32>
    %11 = arith.maximumf %9, %10 : vector<10x128xf32>
    %12 = vector.broadcast %2 : vector<10x1xf32> to vector<10x128xf32>
    %13 = arith.mulf %12, %11 : vector<10x128xf32>
    %cst_6 = arith.constant dense<0.000000e+00> : vector<128xf32>
    %14 = vector.multi_reduction <add>, %13, %cst_6 [0] : vector<10x128xf32> to vector<128xf32>
    %15 = vector.shape_cast %14 : vector<128xf32> to vector<1x128xf32>
    %16 = vector.broadcast %3 : vector<1x1xf32> to vector<1x128xf32>
    %17 = arith.addf %15, %16 : vector<1x128xf32>
    %c0_7 = arith.constant 0 : index
    %c0_8 = arith.constant 0 : index
    %18 = vector.load %arg2[%c0_7, %c0_8] : memref<1x128xf32, #tpu.memory_space<vmem>>, vector<1x128xf32>
    tpu.vector_store %arg2[%c0_7, %c0_8], %17 {strides = array<i32>} : memref<1x128xf32, #tpu.memory_space<vmem>>, vector<1x128xf32>,
    return
  }
}

</mosaic_0001>

<llo_original>
// kernel: net_forward.1
$region0: #{net_forward.1}
  #allocation0 [shape = 'u32[]', space=smem, size = 0x4, offset = 0x4, fixed_abs, tag = 'smem constant byte address 0x4 - core index']
  #allocation1 [shape = 'u32[72,128]{1,0:T(1,128)}', space=vmem, size = 0x9000, scoped, tag = 'internal scratch']
  %s0 = inlined_call_operand.vmem [shape: f32[1,128], index: 0, kind: input, shape index: {}]
  %s1 = inlined_call_operand.vmem [shape: f32[10,4], index: 1, kind: input, shape index: {}]
  %s2 = inlined_call_operand.vmem [shape: f32[1,128], index: 2, kind: output, shape index: {}]
  %s3 = sld [smem:[#allocation0]]
  $region18: #{net_forward.1} parent=0
    _
  %s5 = ssub.s32 1, %s3
  %s6 = scalar_select 0, %s5, %s3
  // Predicated region
  $region2: #{net_forward.1} parent=0 // pred_check
    _
  $region3: #{net_forward.1} parent=0 // pred_check_branch
    %8 = sbr.rel (0) target = $region5
  $region4: #{net_forward.1} parent=0 // pred_region
    _
  $region5: #{net_forward.1} parent=0 // pred_fallthru
    _
  // Predicated region
  $region6: #{net_forward.1} parent=0 // pred_check
    _
  $region7: #{net_forward.1} parent=0 // pred_check_branch
    %10 = sbr.rel (0) target = $region9
  $region8: #{net_forward.1} parent=0 // pred_region
    _
  $region9: #{net_forward.1} parent=0 // pred_fallthru
    _
  %v11 = vld [vmem:[%s1] sm:$0xff]
  %v12 = vld [vmem:[%s1 + $0x8] sm:$0x3]
  %v13 = vld [vmem:[%s1] sm:$0x1]
  %v14 = vld [vmem:[%s0] sm:$0x1]
  %16 = vset.pattern.permute.xlu0 0
  %17 = vperm.xlu0 %16, %v11
  %v18 = vpop.permute.xlu0 %17
  %21 = vset.pattern.permute.xlu0 0
  %22 = vperm.xlu0 %21, %v12
  %v23 = vpop.permute.xlu0 %22
  %v26 = vperm.slane %v14, 0
  %v28 = vmul.f32 %v18, %v26
  %v29 = vmul.f32 %v23, %v26
  %30 = vset.pattern.permute.xlu0 1
  %31 = vperm.xlu0 %30, %v11
  %v32 = vpop.permute.xlu0 %31
  %34 = vset.pattern.permute.xlu0 1
  %35 = vperm.xlu0 %34, %v12
  %v36 = vpop.permute.xlu0 %35
  %v38 = vadd.f32 %v28, %v32
  %v39 = vadd.f32 %v29, %v36
  %v40 = vmax.f32 %v38, 0.0
  %v41 = vmax.f32 %v39, 0.0
  %42 = vset.pattern.permute.xlu0 2
  %43 = vperm.xlu0 %42, %v11
  %v44 = vpop.permute.xlu0 %43
  %46 = vset.pattern.permute.xlu0 2
  %47 = vperm.xlu0 %46, %v12
  %v48 = vpop.permute.xlu0 %47
  %v50 = vmul.f32 %v44, %v40
  %v51 = vmul.f32 %v48, %v41
  %vm52 = vcmask 1041408
  %v53 = vsel %vm52, %v51, 0.0
  %v54 = vadd.f32 %v50, %v53
  %v55 = vrot.slane %v54, 4
  %v56 = vadd.f32 %v54, %v55
  %v57 = vrot.slane %v56, 2
  %v58 = vadd.f32 %v56, %v57
  %v59 = vrot.slane %v58, 1
  %v60 = vadd.f32 %v58, %v59
  %62 = vset.pattern.permute.xlu0 3
  %63 = vperm.xlu0 %62, %v13
  %v64 = vpop.permute.xlu0 %63
  %v66 = vadd.f32 %v60, %v64
  %67 = vst [vmem:[%s2] sm:$0x1] %v66
  // Predicated region
  $region10: #{net_forward.1} parent=0 // pred_check
    _
  $region11: #{net_forward.1} parent=0 // pred_check_branch
    %69 = sbr.rel (0) target = $region13
  $region12: #{net_forward.1} parent=0 // pred_region
    _
  $region13: #{net_forward.1} parent=0 // pred_fallthru
    _
  // Predicated region
  $region14: #{net_forward.1} parent=0 // pred_check
    _
  $region15: #{net_forward.1} parent=0 // pred_check_branch
    %71 = sbr.rel (0) target = $region17
  $region16: #{net_forward.1} parent=0 // pred_region
    _
  $region17: #{net_forward.1} parent=0 // pred_fallthru
    _

</llo_original>
